<compile_context>
chip_gen: v7x
topology: tpu7x:2x2x1
jax: 0.10.0
libtpu: 0.0.40
codegen_flags: <defaults>
</compile_context>

<pallas_src>
import jax
import jax.numpy as jnp
from jax.experimental import pallas as pl
from jax.experimental.pallas import tpu as pltpu


def _normalize_kernel(x_ref, mb_ref, o_ref):
    # x_ref:  (row_tile, col_tile) image slab in VMEM.
    # mb_ref: (row_tile, 2) per-row constants: col 0 = mean, col 1 = 1/std.
    mean = mb_ref[:, 0:1]       # (row_tile, 1) -> lane broadcast on the VPU
    inv_std = mb_ref[:, 1:2]
    o_ref[...] = (x_ref[...] - mean) * inv_std


def _sublane_granularity(dtype):
    itemsize = jnp.dtype(dtype).itemsize
    return {4: 8, 2: 16, 1: 32}.get(itemsize, 8)


def _target_block_bytes():
    """Per-generation block budget (bytes of x per block)."""
    try:
        kind = jax.devices()[0].device_kind.lower()
    except Exception:
        kind = ""
    if "v7" in kind:
        return 8 * 1024 * 1024   # fast HBM -> amortize per-step overhead hard
    if "v6" in kind:
        return 6 * 1024 * 1024   # fits 4x block well inside 32 MiB scoped VMEM
    if "v5" in kind:
        return 2 * 1024 * 1024   # stay well under the 16 MiB default scoped VMEM
    return 4 * 1024 * 1024


def normalize(x, mean, std, *, target_block_bytes=None):
    """Pallas TPU implementation of the PyTorch `Normalize` module.

    x:    (N, C, H, W)
    mean: (C,)
    std:  (C,)
    """
    N, C, H, W = x.shape
    dtype = x.dtype
    itemsize = jnp.dtype(dtype).itemsize
    sub = _sublane_granularity(dtype)
    if target_block_bytes is None:
        target_block_bytes = _target_block_bytes()

    R = N * C          # one row per (image, channel)
    L = H * W          # flattened spatial dims -> lane axis (contiguous in NCHW)

    # Lane-dense 2D view (free for NCHW-contiguous inputs).
    x2 = x.reshape(R, L)

    # Per-row constants packed into one (R, 2) side array: [mean, 1/std].
    mean = jnp.asarray(mean, dtype=dtype)
    std = jnp.asarray(std, dtype=dtype)
    row_mean = jnp.tile(mean, N)                     # (R,)
    row_inv = jnp.tile((1.0 / std).astype(dtype), N)  # (R,)
    mb = jnp.stack([row_mean, row_inv], axis=1)      # (R, 2)

    row_bytes = L * itemsize

    # --- Tile selection (cdiv / ragged; no divisor search) -----------------
    if sub * row_bytes <= target_block_bytes or L <= 128:
        # Common case: whole rows per block -> fully contiguous HBM DMA.
        col_tile = L
        rows_fit = max(sub, (target_block_bytes // max(row_bytes, 1)) // sub * sub)
        row_tile = R if R <= rows_fit else rows_fit
    else:
        # A single sublane-group of full rows exceeds the budget: split lanes.
        row_tile = R if R < sub else sub
        col_tile = (target_block_bytes // (row_tile * itemsize)) // 128 * 128
        col_tile = max(128, min(col_tile, L))

    # v7x megacore: for non-trivial inputs make sure the row grid has >= 2
    # blocks so both TensorCores (and their DMA engines) get work.
    total_bytes = R * L * itemsize
    if (col_tile == L and row_tile == R and R >= 2 * sub
            and total_bytes >= (1 << 20)):
        half = ((R + 1) // 2 + sub - 1) // sub * sub
        row_tile = min(row_tile, half)

    grid = (pl.cdiv(R, row_tile), pl.cdiv(L, col_tile))

    # Explicit VMEM budget: double-buffered in + out blocks, the padded
    # (row_tile, 128-lane) side buffer, plus headroom.
    block_bytes = row_tile * col_tile * itemsize
    side_bytes = row_tile * 128 * itemsize
    vmem_limit = 4 * block_bytes + 2 * side_bytes + 4 * 1024 * 1024
    vmem_limit = int(max(16 * 1024 * 1024, min(vmem_limit, 64 * 1024 * 1024)))

    out2 = pl.pallas_call(
        _normalize_kernel,
        out_shape=jax.ShapeDtypeStruct((R, L), dtype),
        grid=grid,
        in_specs=[
            pl.BlockSpec((row_tile, col_tile), lambda i, j: (i, j)),
            pl.BlockSpec((row_tile, 2), lambda i, j: (i, 0)),
        ],
        out_specs=pl.BlockSpec((row_tile, col_tile), lambda i, j: (i, j)),
        compiler_params=pltpu.CompilerParams(
            dimension_semantics=("parallel", "parallel"),
            vmem_limit_bytes=vmem_limit,
        ),
    )(x2, mb)

    return out2.reshape(N, C, H, W)


if __name__ == "__main__":
    key = jax.random.PRNGKey(0)
    N, C, H, W = 2, 4, 16, 16

    x = jax.random.uniform(key, (N, C, H, W), dtype=jnp.float32)

    # Deterministic per-channel normalization constants (module __init__ args).
    mean = jnp.array([0.485, 0.456, 0.406, 0.5][:C], dtype=jnp.float32)
    std = jnp.array([0.229, 0.224, 0.225, 0.25][:C], dtype=jnp.float32)

    out = normalize(x, mean, std)
    out = jax.block_until_ready(out)

    # Pure-JAX reference (mirrors torch broadcasting: mean[:, None, None]).
    ref = (x - mean[:, None, None]) / std[:, None, None]
    assert out.shape == x.shape and out.dtype == x.dtype
    assert jnp.allclose(out, ref, atol=1e-6, rtol=1e-5)

    print("KERNEL_OK")
</pallas_src>

<mosaic_0001>
module attributes {stable_mosaic.version = 11 : i64} {
  func.func @_normalize_kernel(%arg0: i32, %arg1: i32, %arg2: memref<8x256xf32, #tpu.memory_space<vmem>>, %arg3: memref<8x2xf32, #tpu.memory_space<vmem>>, %arg4: memref<8x256xf32, #tpu.memory_space<vmem>>) attributes {dimension_semantics = [#tpu.dimension_semantics<parallel>, #tpu.dimension_semantics<parallel>], iteration_bounds = array<i64: 1, 1>, scalar_prefetch = 0 : i64, scratch_operands = 0 : i64, tpu.core_type = #tpu.core_type<tc>, window_params = [{transform_indices = @transform_0, window_bounds = array<i64: 8, 256>}, {transform_indices = @transform_1, window_bounds = array<i64: 8, 2>}, {transform_indices = @transform_2, window_bounds = array<i64: 8, 256>}]} {
    %c0 = arith.constant 0 : index
    %c0_0 = arith.constant 0 : index
    %0 = vector.load %arg3[%c0, %c0_0] : memref<8x2xf32, #tpu.memory_space<vmem>>, vector<8x1xf32>
    %c0_1 = arith.constant 0 : index
    %c1 = arith.constant 1 : index
    %1 = vector.load %arg3[%c0_1, %c1] : memref<8x2xf32, #tpu.memory_space<vmem>>, vector<8x1xf32>
    %c0_2 = arith.constant 0 : index
    %c0_3 = arith.constant 0 : index
    %2 = vector.load %arg2[%c0_2, %c0_3] : memref<8x256xf32, #tpu.memory_space<vmem>>, vector<8x256xf32>
    %3 = vector.broadcast %0 : vector<8x1xf32> to vector<8x256xf32>
    %4 = arith.subf %2, %3 : vector<8x256xf32>
    %5 = vector.broadcast %1 : vector<8x1xf32> to vector<8x256xf32>
    %6 = arith.mulf %4, %5 : vector<8x256xf32>
    %c0_4 = arith.constant 0 : index
    %c0_5 = arith.constant 0 : index
    %7 = vector.load %arg4[%c0_4, %c0_5] : memref<8x256xf32, #tpu.memory_space<vmem>>, vector<8x256xf32>
    tpu.vector_store %arg4[%c0_4, %c0_5], %6 {strides = array<i32>} : memref<8x256xf32, #tpu.memory_space<vmem>>, vector<8x256xf32>,
    return
  }
  func.func @transform_0(%arg0: i32, %arg1: i32) -> (i32, i32) {
    %c0_i32 = arith.constant 0 : i32
    return %arg0, %arg1 : i32, i32
  }
  func.func @transform_1(%arg0: i32, %arg1: i32) -> (i32, i32) {
    %c0_i32 = arith.constant 0 : i32
    %c0_i32_0 = arith.constant 0 : i32
    return %arg0, %c0_i32 : i32, i32
  }
  func.func @transform_2(%arg0: i32, %arg1: i32) -> (i32, i32) {
    %c0_i32 = arith.constant 0 : i32
    return %arg0, %arg1 : i32, i32
  }
}

</mosaic_0001>

<llo_original>
// kernel: tpu_custom_call.1
$region0: #{tpu_custom_call.1}
  #allocation0 [shape = 'u32[]', space=smem, size = 0x4, offset = 0x4, fixed_abs, tag = 'smem constant byte address 0x4 - core index']
  #allocation1 [shape = 'u32[144,128]{1,0:T(1,128)}', space=vmem, size = 0x12000, scoped, tag = 'internal scratch']
  %s0 = inlined_call_operand.hbm [shape: f32[8,256], index: 0, kind: input, shape index: {}]
  %s1 = inlined_call_operand.vmem [shape: f32[8,2], index: 1, kind: input, shape index: {}]
  %s2 = inlined_call_operand.hbm [shape: f32[8,256], index: 2, kind: output, shape index: {}]
  %s3 = sld [smem:[#allocation0]]
  $region22: #{tpu_custom_call.1} parent=0
    _
  %s5 = ssub.s32 1, %s3
  %s6 = scalar_select 0, %s5, %s3
  $region1: #{tpu_custom_call.1} parent=0
    #allocation2 [shape = 'u8[8192]{0}', space=vmem, size = 0x2000, scoped, tag = 'input window, operand 0, single buffered']
    #allocation3 [shape = 's32[1]{0}', space=sflag, size = 0x4, scoped, tag = 'scoped memory for tpu_custom_call.1']
    #allocation4 [shape = 's32[1]{0}', space=sflag, size = 0x4, scoped, tag = 'scoped memory for tpu_custom_call.1']
    #allocation5 [shape = 'u8[8192]{0}', space=vmem, size = 0x2000, scoped, tag = 'output window, operand 0, single buffered']
    %7 = vsyncpa [#allocation3], 0
    %8 = vsyncpa [#allocation4], 0
    // Predicated region
    $region2: #{tpu_custom_call.1} parent=1 // pred_check
      _
    $region3: #{tpu_custom_call.1} parent=1 // pred_check_branch
      %10 = sbr.rel (0) target = $region5
    $region4: #{tpu_custom_call.1} parent=1 // pred_region
      %s12 = ssub.s32 256, 256
      %13 = vsyncadd [#allocation3], %s12
      %s15 = sshll.u32 [#allocation2], 4
      %s16 = int_to_ptr.vmem [resolvable:$true] %s15
      %18 = dma.hbm_to_vmem [thread:$0]  %s0, 256, %s16, [#allocation3]
    $region5: #{tpu_custom_call.1} parent=1 // pred_fallthru
      _
    // Predicated region
    $region6: #{tpu_custom_call.1} parent=1 // pred_check
      _
    $region7: #{tpu_custom_call.1} parent=1 // pred_check_branch
      %20 = sbr.rel (0) target = $region9
    $region8: #{tpu_custom_call.1} parent=1 // pred_region
      _
    $region9: #{tpu_custom_call.1} parent=1 // pred_fallthru
      _
    // Predicated region
    $region10: #{tpu_custom_call.1} parent=1 // pred_check
      _
    $region11: #{tpu_custom_call.1} parent=1 // pred_check_branch
      %22 = sbr.rel (0) target = $region13
    $region12: #{tpu_custom_call.1} parent=1 // pred_region
      %23 = dma.done [#allocation3], 256
    $region13: #{tpu_custom_call.1} parent=1 // pred_fallthru
      _
    %v24 = vld [vmem:[%s1] sm:$0xff]
    %v25 = vld [vmem:[#allocation2] sm:$0xff]
    %v26 = vld [vmem:[#allocation2 + $0x8] sm:$0xff]
    %28 = vset.pattern.permute.xlu0 0
    %29 = vperm.xlu0 %28, %v24
    %v30 = vpop.permute.xlu0 %29
    %v32 = vsub.f32 %v25, %v30
    %v33 = vsub.f32 %v26, %v30
    %34 = vset.pattern.permute.xlu0 1
    %35 = vperm.xlu0 %34, %v24
    %v36 = vpop.permute.xlu0 %35
    %v38 = vmul.f32 %v32, %v36
    %v39 = vmul.f32 %v33, %v36
    %40 = vst [vmem:[#allocation5] sm:$0xff] %v38
    %41 = vst [vmem:[#allocation5 + $0x8] sm:$0xff] %v39
    // Predicated region
    $region14: #{tpu_custom_call.1} parent=1 // pred_check
      _
    $region15: #{tpu_custom_call.1} parent=1 // pred_check_branch
      %43 = sbr.rel (0) target = $region17
    $region16: #{tpu_custom_call.1} parent=1 // pred_region
      %s45 = ssub.s32 256, 256
      %46 = vsyncadd [#allocation4], %s45
      %s48 = sshll.u32 [#allocation5], 4
      %s49 = int_to_ptr.vmem [resolvable:$true] %s48
      %51 = dma.vmem_to_hbm [thread:$0]  %s49, 256, %s2, [#allocation4]
    $region17: #{tpu_custom_call.1} parent=1 // pred_fallthru
      _
    // Predicated region
    $region18: #{tpu_custom_call.1} parent=1 // pred_check
      _
    $region19: #{tpu_custom_call.1} parent=1 // pred_check_branch
      %53 = sbr.rel (0) target = $region21
    $region20: #{tpu_custom_call.1} parent=1 // pred_region
      %54 = dma.done [#allocation4], 256
    $region21: #{tpu_custom_call.1} parent=1 // pred_fallthru
      _
    %55 = vsyncpa [#allocation3], 1
    %56 = vsyncpa [#allocation4], 1

</llo_original>
